<compile_context>
chip_gen: v6e
topology: v6e:2x2x1
jax: 0.10.0
libtpu: 0.0.40
codegen_flags: <defaults>
</compile_context>

<pallas_src>
import jax
import jax.numpy as jnp
from jax.experimental import pallas as pl
from jax.experimental.pallas import tpu as pltpu

LOG_STD_MIN = -20.0
LOG_STD_MAX = 2.0
LN_EPS = 1e-5
_LANE = 128
_SUBLANE = 8


def _round_up(n, m):
    return ((n + m - 1) // m) * m


def _layernorm_cols(x, gamma, beta):
    # x: (features, TILE_B); normalize over the feature (sublane) axis.
    mu = jnp.mean(x, axis=0, keepdims=True)
    var = jnp.mean((x - mu) ** 2, axis=0, keepdims=True)
    inv = jax.lax.rsqrt(var + LN_EPS)
    return (x - mu) * inv * gamma + beta


def _batch_padding(B):
    """Pad batch to lane multiples and pick TILE_B (lane axis tile)."""
    B_pad = _round_up(max(B, 1), _LANE)
    TILE_B = min(1024, B_pad)
    B_pad = _round_up(B_pad, TILE_B)
    # Give megacore (v7x) at least two grid steps when the batch allows it.
    if B_pad == TILE_B and B_pad % 256 == 0:
        TILE_B = B_pad // 2
    return B_pad, TILE_B


def _make_kernel(dims, offs):
    S, H1, H2, A = dims
    (o_g0, o_be0, o_b1, o_g1, o_be1, o_b2, o_g2, o_be2,
     o_bmu, o_std, o_c) = offs

    def kernel(state_ref, eps_ref, pvec_ref, w1_ref, w2_ref, wmu_ref,
               action_ref, logp_ref):
        p = pvec_ref  # packed (P, 1) per-feature params; 8-aligned static slices

        x = state_ref[...].astype(jnp.float32)                      # (S, TILE_B)

        # base: LayerNorm -> (Linear -> ReLU -> LayerNorm) x 2, batch on lanes
        x = _layernorm_cols(x, p[o_g0:o_g0 + S, :], p[o_be0:o_be0 + S, :])

        h = jnp.dot(w1_ref[...], x, preferred_element_type=jnp.float32)  # (H1,TB)
        h = h + p[o_b1:o_b1 + H1, :]
        h = jnp.maximum(h, 0.0)
        h = _layernorm_cols(h, p[o_g1:o_g1 + H1, :], p[o_be1:o_be1 + H1, :])

        h = jnp.dot(w2_ref[...], h, preferred_element_type=jnp.float32)  # (H2,TB)
        h = h + p[o_b2:o_b2 + H2, :]
        h = jnp.maximum(h, 0.0)
        h = _layernorm_cols(h, p[o_g2:o_g2 + H2, :], p[o_be2:o_be2 + H2, :])

        # tanh-squashed Gaussian head, state-independent std (hoisted in wrapper)
        mu = jnp.dot(wmu_ref[...], h, preferred_element_type=jnp.float32)  # (A,TB)
        mu = mu + p[o_bmu:o_bmu + A, :]
        std = p[o_std:o_std + A, :]          # exp(clip(log_std)), (A, 1)
        c = p[o_c:o_c + A, :]                # -log_std - 0.5*log(2*pi), (A, 1)

        eps = eps_ref[...]                   # (A, TILE_B) reparameterization noise
        pre_tanh = mu + std * eps
        action = jnp.tanh(pre_tanh)

        # N(mu, std) log-prob of pre_tanh: -0.5*eps^2 - log_std - 0.5*log(2*pi)
        logp = -0.5 * eps * eps + c
        # tanh change of variables: log(1 - tanh(u)^2) = 2*(log2 - u - softplus(-2u))
        z = -2.0 * pre_tanh
        softplus_z = jnp.maximum(z, 0.0) + jnp.log1p(jnp.exp(-jnp.abs(z)))
        logp = logp - 2.0 * (jnp.log(2.0) - pre_tanh - softplus_z)

        action_ref[...] = action                                   # (A, TILE_B)
        logp_ref[...] = jnp.sum(logp, axis=0, keepdims=True)        # (1, TILE_B)

    return kernel


@jax.jit
def stochastic_policy_forward(state, params, key):
    """Returns (action, log_prob) like StochasticPolicy.forward(deterministic=False)."""
    B, S = state.shape
    H1 = params["w1"].shape[1]
    H2 = params["w2"].shape[1]
    A = params["wmu"].shape[1]

    # ---- batch-on-lanes layout ------------------------------------------
    B_pad, TILE_B = _batch_padding(B)
    # NOTE: padded batch columns are all-zero; LayerNorm on them gives finite
    # rsqrt(eps)-scaled junk that is sliced off below — benign, never read.
    state_t = jnp.pad(state.astype(jnp.float32).T, ((0, 0), (0, B_pad - B)))

    # Reparameterization noise drawn at exactly the used shape (A, B_pad).
    eps = jax.random.normal(key, (A, B_pad), jnp.float32)

    # ---- hoist parameter-only math, pack all small vectors into one input --
    log_std = jnp.clip(params["log_std"], LOG_STD_MIN, LOG_STD_MAX)
    std = jnp.exp(log_std)
    logp_const = -log_std - 0.5 * jnp.log(2.0 * jnp.pi)

    segments = (
        params["g0"], params["be0"],
        params["b1"], params["g1"], params["be1"],
        params["b2"], params["g2"], params["be2"],
        params["bmu"], std, logp_const,
    )
    offs, chunks, off = [], [], 0
    for seg in segments:
        v = seg.reshape(-1).astype(jnp.float32)
        d = v.shape[0]
        d_pad = _round_up(d, _SUBLANE)  # keep every segment sublane-aligned
        offs.append(off)
        chunks.append(jnp.pad(v, (0, d_pad - d)))
        off += d_pad
    pvec = jnp.concatenate(chunks).reshape(off, 1)   # (P, 1): one resident DMA
    P = off

    # Pre-transposed weights so the kernel computes (out_dim, TILE_B) tiles.
    w1_t = params["w1"].astype(jnp.float32).T     # (H1, S)
    w2_t = params["w2"].astype(jnp.float32).T     # (H2, H1)
    wmu_t = params["wmu"].astype(jnp.float32).T   # (A, H2)

    kernel = _make_kernel((S, H1, H2, A), tuple(offs))
    grid = (B_pad // TILE_B,)

    flops = 2 * B_pad * (S * H1 + H1 * H2 + H2 * A) + 20 * B_pad * (S + H1 + H2 + A)
    cost = pl.CostEstimate(
        flops=int(flops),
        transcendentals=int(B_pad * (3 + 3 * A)),
        bytes_accessed=int(state_t.size + eps.size + pvec.size
                           + w1_t.size + w2_t.size + wmu_t.size
                           + B_pad * (A + 1)) * 4,
    )

    action_t, logp_t = pl.pallas_call(
        kernel,
        out_shape=(
            jax.ShapeDtypeStruct((A, B_pad), jnp.float32),
            jax.ShapeDtypeStruct((1, B_pad), jnp.float32),
        ),
        grid=grid,
        in_specs=[
            pl.BlockSpec((S, TILE_B), lambda i: (0, i)),   # state tile (lane-dense)
            pl.BlockSpec((A, TILE_B), lambda i: (0, i)),   # eps tile
            pl.BlockSpec((P, 1), lambda i: (0, 0)),        # packed params (resident)
            pl.BlockSpec((H1, S), lambda i: (0, 0)),        # w1^T (resident)
            pl.BlockSpec((H2, H1), lambda i: (0, 0)),       # w2^T (resident)
            pl.BlockSpec((A, H2), lambda i: (0, 0)),        # wmu^T (resident)
        ],
        out_specs=(
            pl.BlockSpec((A, TILE_B), lambda i: (0, i)),    # action (lane-dense)
            pl.BlockSpec((1, TILE_B), lambda i: (0, i)),    # summed log-prob
        ),
        compiler_params=pltpu.CompilerParams(
            dimension_semantics=("parallel",),
        ),
        cost_estimate=cost,
    )(state_t, eps, pvec, w1_t, w2_t, wmu_t)

    action = action_t[:, :B].T            # (B, A)
    log_prob = logp_t[:, :B].T             # (B, 1)
    return action, log_prob


def init_params(key, state_size, hidden_sizes, action_dim):
    """Deterministic synthetic init (relu-gain scaled linears, unit LayerNorms)."""
    h1, h2 = hidden_sizes
    ks = jax.random.split(key, 8)
    gain = jnp.sqrt(2.0)  # nn.init.calculate_gain('relu')

    def lin(k, fan_in, fan_out):
        w = gain * jax.random.normal(k, (fan_in, fan_out), jnp.float32) / jnp.sqrt(fan_in)
        b = jnp.zeros((1, fan_out), jnp.float32)
        return w, b

    w1, b1 = lin(ks[0], state_size, h1)
    w2, b2 = lin(ks[1], h1, h2)
    wmu = jax.random.normal(ks[2], (h2, action_dim), jnp.float32) / jnp.sqrt(h2)
    bmu = jnp.zeros((1, action_dim), jnp.float32)

    return {
        "g0": jnp.ones((1, state_size), jnp.float32),
        "be0": jnp.zeros((1, state_size), jnp.float32),
        "w1": w1, "b1": b1,
        "g1": jnp.ones((1, h1), jnp.float32),
        "be1": jnp.zeros((1, h1), jnp.float32),
        "w2": w2, "b2": b2,
        "g2": jnp.ones((1, h2), jnp.float32),
        "be2": jnp.zeros((1, h2), jnp.float32),
        "wmu": wmu, "bmu": bmu,
        # state_dependent_std=False -> learned per-dim log_std parameter
        "log_std": jnp.full((1, action_dim), -0.5, jnp.float32),
    }


def _reference_forward(state, params, key):
    """Pure-JAX reference using the SAME noise draw as the kernel wrapper."""
    B = state.shape[0]
    A = params["wmu"].shape[1]
    B_pad, _ = _batch_padding(B)
    eps = jax.random.normal(key, (A, B_pad), jnp.float32)[:, :B].T   # (B, A)

    def ln(x, g, b):
        mu = jnp.mean(x, axis=-1, keepdims=True)
        var = jnp.mean((x - mu) ** 2, axis=-1, keepdims=True)
        return (x - mu) * jax.lax.rsqrt(var + LN_EPS) * g + b

    x = ln(state, params["g0"], params["be0"])
    h = jnp.maximum(x @ params["w1"] + params["b1"], 0.0)
    h = ln(h, params["g1"], params["be1"])
    h = jnp.maximum(h @ params["w2"] + params["b2"], 0.0)
    h = ln(h, params["g2"], params["be2"])
    mu = h @ params["wmu"] + params["bmu"]

    log_std = jnp.clip(params["log_std"], LOG_STD_MIN, LOG_STD_MAX)
    std = jnp.exp(log_std)

    pre = mu + std * eps
    action = jnp.tanh(pre)
    logp = -0.5 * eps * eps - log_std - 0.5 * jnp.log(2.0 * jnp.pi)
    logp = logp - 2.0 * (jnp.log(2.0) - pre - jax.nn.softplus(-2.0 * pre))
    return action, jnp.sum(logp, axis=-1, keepdims=True)


if __name__ == "__main__":
    B, STATE, HIDDEN, ACT = 8, 16, [32, 32], 8

    root = jax.random.PRNGKey(0)
    k_param, k_state, k_noise = jax.random.split(root, 3)

    params = init_params(k_param, STATE, HIDDEN, ACT)
    state = jax.random.normal(k_state, (B, STATE), jnp.float32)

    action, log_prob = stochastic_policy_forward(state, params, k_noise)
    jax.block_until_ready((action, log_prob))

    assert action.shape == (B, ACT) and log_prob.shape == (B, 1)
    assert bool(jnp.all(jnp.isfinite(action))) and bool(jnp.all(jnp.isfinite(log_prob)))
    assert bool(jnp.all(jnp.abs(action) <= 1.0))

    # Cross-check against a pure-JAX reference using the identical noise draw.
    ref_action, ref_logp = _reference_forward(state, params, k_noise)
    assert bool(jnp.max(jnp.abs(ref_action - action)) < 2e-2)
    assert bool(jnp.max(jnp.abs(ref_logp - log_prob)) < 5e-2)

    print("KERNEL_OK")
</pallas_src>

<mosaic_0001>
module attributes {stable_mosaic.version = 11 : i64} {
  func.func @kernel(%arg0: i32, %arg1: memref<16x128xf32, #tpu.memory_space<vmem>>, %arg2: memref<8x128xf32, #tpu.memory_space<vmem>>, %arg3: memref<248x1xf32, #tpu.memory_space<vmem>>, %arg4: memref<32x16xf32, #tpu.memory_space<vmem>>, %arg5: memref<32x32xf32, #tpu.memory_space<vmem>>, %arg6: memref<8x32xf32, #tpu.memory_space<vmem>>, %arg7: memref<8x128xf32, #tpu.memory_space<vmem>>, %arg8: memref<1x128xf32, #tpu.memory_space<vmem>>) attributes {dimension_semantics = [#tpu.dimension_semantics<parallel>], iteration_bounds = array<i64: 1>, scalar_prefetch = 0 : i64, scratch_operands = 0 : i64, tpu.core_type = #tpu.core_type<tc>, window_params = [{transform_indices = @transform_0, window_bounds = array<i64: 16, 128>}, {transform_indices = @transform_1, window_bounds = array<i64: 8, 128>}, {pipeline_mode = #tpu.pipeline_mode<synchronous>, transform_indices = @transform_2, window_bounds = array<i64: 248, 1>}, {pipeline_mode = #tpu.pipeline_mode<synchronous>, transform_indices = @transform_3, window_bounds = array<i64: 32, 16>}, {pipeline_mode = #tpu.pipeline_mode<synchronous>, transform_indices = @transform_4, window_bounds = array<i64: 32, 32>}, {pipeline_mode = #tpu.pipeline_mode<synchronous>, transform_indices = @transform_5, window_bounds = array<i64: 8, 32>}, {transform_indices = @transform_6, window_bounds = array<i64: 8, 128>}, {transform_indices = @transform_7, window_bounds = array<i64: 1, 128>}]} {
    %c0 = arith.constant 0 : index
    %c0_0 = arith.constant 0 : index
    %0 = vector.load %arg1[%c0, %c0_0] : memref<16x128xf32, #tpu.memory_space<vmem>>, vector<16x128xf32>
    %c0_1 = arith.constant 0 : index
    %c0_2 = arith.constant 0 : index
    %1 = vector.load %arg3[%c0_1, %c0_2] : memref<248x1xf32, #tpu.memory_space<vmem>>, vector<16x1xf32>
    %c16 = arith.constant 16 : index
    %c0_3 = arith.constant 0 : index
    %2 = vector.load %arg3[%c16, %c0_3] : memref<248x1xf32, #tpu.memory_space<vmem>>, vector<16x1xf32>
    %cst = arith.constant dense<0.000000e+00> : vector<128xf32>
    %3 = vector.multi_reduction <add>, %0, %cst [0] : vector<16x128xf32> to vector<128xf32>
    %4 = vector.shape_cast %3 : vector<128xf32> to vector<1x128xf32>
    %cst_4 = arith.constant 1.600000e+01 : f32
    %5 = vector.broadcast %cst_4 : f32 to vector<1x128xf32>
    %6 = arith.divf %4, %5 : vector<1x128xf32>
    %7 = vector.broadcast %6 : vector<1x128xf32> to vector<16x128xf32>
    %8 = arith.subf %0, %7 : vector<16x128xf32>
    %9 = arith.mulf %8, %8 : vector<16x128xf32>
    %cst_5 = arith.constant dense<0.000000e+00> : vector<128xf32>
    %10 = vector.multi_reduction <add>, %9, %cst_5 [0] : vector<16x128xf32> to vector<128xf32>
    %11 = vector.shape_cast %10 : vector<128xf32> to vector<1x128xf32>
    %cst_6 = arith.constant 1.600000e+01 : f32
    %12 = vector.broadcast %cst_6 : f32 to vector<1x128xf32>
    %13 = arith.divf %11, %12 : vector<1x128xf32>
    %cst_7 = arith.constant 9.99999974E-6 : f32
    %14 = vector.broadcast %cst_7 : f32 to vector<1x128xf32>
    %15 = arith.addf %13, %14 : vector<1x128xf32>
    %16 = math.rsqrt %15 : vector<1x128xf32>
    %17 = vector.broadcast %6 : vector<1x128xf32> to vector<16x128xf32>
    %18 = arith.subf %0, %17 : vector<16x128xf32>
    %19 = vector.broadcast %16 : vector<1x128xf32> to vector<16x128xf32>
    %20 = arith.mulf %18, %19 : vector<16x128xf32>
    %21 = vector.broadcast %1 : vector<16x1xf32> to vector<16x128xf32>
    %22 = arith.mulf %20, %21 : vector<16x128xf32>
    %23 = vector.broadcast %2 : vector<16x1xf32> to vector<16x128xf32>
    %24 = arith.addf %22, %23 : vector<16x128xf32>
    %c0_8 = arith.constant 0 : index
    %c0_9 = arith.constant 0 : index
    %25 = vector.load %arg4[%c0_8, %c0_9] : memref<32x16xf32, #tpu.memory_space<vmem>>, vector<32x16xf32>
    %cst_10 = arith.constant dense<0.000000e+00> : vector<32x128xf32>
    %26 = tpu.matmul %25, %24, %cst_10 {dimension_numbers = #tpu.dot_dimension_numbers<[1], [0], [0], [1], [0, 0, 1, 1], [], []>} : vector<32x16xf32>, vector<16x128xf32>, vector<32x128xf32> -> vector<32x128xf32>
    %c32 = arith.constant 32 : index
    %c0_11 = arith.constant 0 : index
    %27 = vector.load %arg3[%c32, %c0_11] : memref<248x1xf32, #tpu.memory_space<vmem>>, vector<32x1xf32>
    %28 = vector.broadcast %27 : vector<32x1xf32> to vector<32x128xf32>
    %29 = arith.addf %26, %28 : vector<32x128xf32>
    %cst_12 = arith.constant 0.000000e+00 : f32
    %30 = vector.broadcast %cst_12 : f32 to vector<32x128xf32>
    %31 = arith.maximumf %29, %30 : vector<32x128xf32>
    %c64 = arith.constant 64 : index
    %c0_13 = arith.constant 0 : index
    %32 = vector.load %arg3[%c64, %c0_13] : memref<248x1xf32, #tpu.memory_space<vmem>>, vector<32x1xf32>
    %c96 = arith.constant 96 : index
    %c0_14 = arith.constant 0 : index
    %33 = vector.load %arg3[%c96, %c0_14] : memref<248x1xf32, #tpu.memory_space<vmem>>, vector<32x1xf32>
    %cst_15 = arith.constant dense<0.000000e+00> : vector<128xf32>
    %34 = vector.multi_reduction <add>, %31, %cst_15 [0] : vector<32x128xf32> to vector<128xf32>
    %35 = vector.shape_cast %34 : vector<128xf32> to vector<1x128xf32>
    %cst_16 = arith.constant 3.200000e+01 : f32
    %36 = vector.broadcast %cst_16 : f32 to vector<1x128xf32>
    %37 = arith.divf %35, %36 : vector<1x128xf32>
    %38 = vector.broadcast %37 : vector<1x128xf32> to vector<32x128xf32>
    %39 = arith.subf %31, %38 : vector<32x128xf32>
    %40 = arith.mulf %39, %39 : vector<32x128xf32>
    %cst_17 = arith.constant dense<0.000000e+00> : vector<128xf32>
    %41 = vector.multi_reduction <add>, %40, %cst_17 [0] : vector<32x128xf32> to vector<128xf32>
    %42 = vector.shape_cast %41 : vector<128xf32> to vector<1x128xf32>
    %cst_18 = arith.constant 3.200000e+01 : f32
    %43 = vector.broadcast %cst_18 : f32 to vector<1x128xf32>
    %44 = arith.divf %42, %43 : vector<1x128xf32>
    %cst_19 = arith.constant 9.99999974E-6 : f32
    %45 = vector.broadcast %cst_19 : f32 to vector<1x128xf32>
    %46 = arith.addf %44, %45 : vector<1x128xf32>
    %47 = math.rsqrt %46 : vector<1x128xf32>
    %48 = vector.broadcast %37 : vector<1x128xf32> to vector<32x128xf32>
    %49 = arith.subf %31, %48 : vector<32x128xf32>
    %50 = vector.broadcast %47 : vector<1x128xf32> to vector<32x128xf32>
    %51 = arith.mulf %49, %50 : vector<32x128xf32>
    %52 = vector.broadcast %32 : vector<32x1xf32> to vector<32x128xf32>
    %53 = arith.mulf %51, %52 : vector<32x128xf32>
    %54 = vector.broadcast %33 : vector<32x1xf32> to vector<32x128xf32>
    %55 = arith.addf %53, %54 : vector<32x128xf32>
    %c0_20 = arith.constant 0 : index
    %c0_21 = arith.constant 0 : index
    %56 = vector.load %arg5[%c0_20, %c0_21] : memref<32x32xf32, #tpu.memory_space<vmem>>, vector<32x32xf32>
    %cst_22 = arith.constant dense<0.000000e+00> : vector<32x128xf32>
    %57 = tpu.matmul %56, %55, %cst_22 {dimension_numbers = #tpu.dot_dimension_numbers<[1], [0], [0], [1], [0, 0, 1, 1], [], []>} : vector<32x32xf32>, vector<32x128xf32>, vector<32x128xf32> -> vector<32x128xf32>
    %c128 = arith.constant 128 : index
    %c0_23 = arith.constant 0 : index
    %58 = vector.load %arg3[%c128, %c0_23] : memref<248x1xf32, #tpu.memory_space<vmem>>, vector<32x1xf32>
    %59 = vector.broadcast %58 : vector<32x1xf32> to vector<32x128xf32>
    %60 = arith.addf %57, %59 : vector<32x128xf32>
    %cst_24 = arith.constant 0.000000e+00 : f32
    %61 = vector.broadcast %cst_24 : f32 to vector<32x128xf32>
    %62 = arith.maximumf %60, %61 : vector<32x128xf32>
    %c160 = arith.constant 160 : index
    %c0_25 = arith.constant 0 : index
    %63 = vector.load %arg3[%c160, %c0_25] : memref<248x1xf32, #tpu.memory_space<vmem>>, vector<32x1xf32>
    %c192 = arith.constant 192 : index
    %c0_26 = arith.constant 0 : index
    %64 = vector.load %arg3[%c192, %c0_26] : memref<248x1xf32, #tpu.memory_space<vmem>>, vector<32x1xf32>
    %cst_27 = arith.constant dense<0.000000e+00> : vector<128xf32>
    %65 = vector.multi_reduction <add>, %62, %cst_27 [0] : vector<32x128xf32> to vector<128xf32>
    %66 = vector.shape_cast %65 : vector<128xf32> to vector<1x128xf32>
    %cst_28 = arith.constant 3.200000e+01 : f32
    %67 = vector.broadcast %cst_28 : f32 to vector<1x128xf32>
    %68 = arith.divf %66, %67 : vector<1x128xf32>
    %69 = vector.broadcast %68 : vector<1x128xf32> to vector<32x128xf32>
    %70 = arith.subf %62, %69 : vector<32x128xf32>
    %71 = arith.mulf %70, %70 : vector<32x128xf32>
    %cst_29 = arith.constant dense<0.000000e+00> : vector<128xf32>
    %72 = vector.multi_reduction <add>, %71, %cst_29 [0] : vector<32x128xf32> to vector<128xf32>
    %73 = vector.shape_cast %72 : vector<128xf32> to vector<1x128xf32>
    %cst_30 = arith.constant 3.200000e+01 : f32
    %74 = vector.broadcast %cst_30 : f32 to vector<1x128xf32>
    %75 = arith.divf %73, %74 : vector<1x128xf32>
    %cst_31 = arith.constant 9.99999974E-6 : f32
    %76 = vector.broadcast %cst_31 : f32 to vector<1x128xf32>
    %77 = arith.addf %75, %76 : vector<1x128xf32>
    %78 = math.rsqrt %77 : vector<1x128xf32>
    %79 = vector.broadcast %68 : vector<1x128xf32> to vector<32x128xf32>
    %80 = arith.subf %62, %79 : vector<32x128xf32>
    %81 = vector.broadcast %78 : vector<1x128xf32> to vector<32x128xf32>
    %82 = arith.mulf %80, %81 : vector<32x128xf32>
    %83 = vector.broadcast %63 : vector<32x1xf32> to vector<32x128xf32>
    %84 = arith.mulf %82, %83 : vector<32x128xf32>
    %85 = vector.broadcast %64 : vector<32x1xf32> to vector<32x128xf32>
    %86 = arith.addf %84, %85 : vector<32x128xf32>
    %c0_32 = arith.constant 0 : index
    %c0_33 = arith.constant 0 : index
    %87 = vector.load %arg6[%c0_32, %c0_33] : memref<8x32xf32, #tpu.memory_space<vmem>>, vector<8x32xf32>
    %cst_34 = arith.constant dense<0.000000e+00> : vector<8x128xf32>
    %88 = tpu.matmul %87, %86, %cst_34 {dimension_numbers = #tpu.dot_dimension_numbers<[1], [0], [0], [1], [0, 0, 1, 1], [], []>} : vector<8x32xf32>, vector<32x128xf32>, vector<8x128xf32> -> vector<8x128xf32>
    %c224 = arith.constant 224 : index
    %c0_35 = arith.constant 0 : index
    %89 = vector.load %arg3[%c224, %c0_35] : memref<248x1xf32, #tpu.memory_space<vmem>>, vector<8x1xf32>
    %90 = vector.broadcast %89 : vector<8x1xf32> to vector<8x128xf32>
    %91 = arith.addf %88, %90 : vector<8x128xf32>
    %c232 = arith.constant 232 : index
    %c0_36 = arith.constant 0 : index
    %92 = vector.load %arg3[%c232, %c0_36] : memref<248x1xf32, #tpu.memory_space<vmem>>, vector<8x1xf32>
    %c240 = arith.constant 240 : index
    %c0_37 = arith.constant 0 : index
    %93 = vector.load %arg3[%c240, %c0_37] : memref<248x1xf32, #tpu.memory_space<vmem>>, vector<8x1xf32>
    %c0_38 = arith.constant 0 : index
    %c0_39 = arith.constant 0 : index
    %94 = vector.load %arg2[%c0_38, %c0_39] : memref<8x128xf32, #tpu.memory_space<vmem>>, vector<8x128xf32>
    %95 = vector.broadcast %92 : vector<8x1xf32> to vector<8x128xf32>
    %96 = arith.mulf %95, %94 : vector<8x128xf32>
    %97 = arith.addf %91, %96 : vector<8x128xf32>
    %98 = math.tanh %97 : vector<8x128xf32>
    %cst_40 = arith.constant -5.000000e-01 : f32
    %99 = vector.broadcast %cst_40 : f32 to vector<8x128xf32>
    %100 = arith.mulf %99, %94 : vector<8x128xf32>
    %101 = arith.mulf %100, %94 : vector<8x128xf32>
    %102 = vector.broadcast %93 : vector<8x1xf32> to vector<8x128xf32>
    %103 = arith.addf %101, %102 : vector<8x128xf32>
    %cst_41 = arith.constant -2.000000e+00 : f32
    %104 = vector.broadcast %cst_41 : f32 to vector<8x128xf32>
    %105 = arith.mulf %104, %97 : vector<8x128xf32>
    %cst_42 = arith.constant 0.000000e+00 : f32
    %106 = vector.broadcast %cst_42 : f32 to vector<8x128xf32>
    %107 = arith.maximumf %105, %106 : vector<8x128xf32>
    %108 = math.absf %105 : vector<8x128xf32>
    %cst_43 = arith.constant 0.000000e+00 : f32
    %109 = vector.broadcast %cst_43 : f32 to vector<8x128xf32>
    %110 = arith.subf %109, %108 : vector<8x128xf32>
    %111 = math.exp %110 : vector<8x128xf32>
    %112 = math.log1p %111 : vector<8x128xf32>
    %113 = arith.addf %107, %112 : vector<8x128xf32>
    %cst_44 = arith.constant 2.000000e+00 : f32
    %114 = math.log %cst_44 : f32
    %115 = vector.broadcast %114 : f32 to vector<8x128xf32>
    %116 = arith.subf %115, %97 : vector<8x128xf32>
    %117 = arith.subf %116, %113 : vector<8x128xf32>
    %cst_45 = arith.constant 2.000000e+00 : f32
    %118 = vector.broadcast %cst_45 : f32 to vector<8x128xf32>
    %119 = arith.mulf %118, %117 : vector<8x128xf32>
    %120 = arith.subf %103, %119 : vector<8x128xf32>
    %c0_46 = arith.constant 0 : index
    %c0_47 = arith.constant 0 : index
    %121 = vector.load %arg7[%c0_46, %c0_47] : memref<8x128xf32, #tpu.memory_space<vmem>>, vector<8x128xf32>
    tpu.vector_store %arg7[%c0_46, %c0_47], %98 {strides = array<i32>} : memref<8x128xf32, #tpu.memory_space<vmem>>, vector<8x128xf32>,
    %cst_48 = arith.constant dense<0.000000e+00> : vector<128xf32>
    %122 = vector.multi_reduction <add>, %120, %cst_48 [0] : vector<8x128xf32> to vector<128xf32>
    %123 = vector.shape_cast %122 : vector<128xf32> to vector<1x128xf32>
    %c0_49 = arith.constant 0 : index
    %c0_50 = arith.constant 0 : index
    %124 = vector.load %arg8[%c0_49, %c0_50] : memref<1x128xf32, #tpu.memory_space<vmem>>, vector<1x128xf32>
    tpu.vector_store %arg8[%c0_49, %c0_50], %123 {strides = array<i32>} : memref<1x128xf32, #tpu.memory_space<vmem>>, vector<1x128xf32>,
    return
  }
  func.func @transform_0(%arg0: i32) -> (i32, i32) {
    %c0_i32 = arith.constant 0 : i32
    %c0_i32_0 = arith.constant 0 : i32
    return %c0_i32, %arg0 : i32, i32
  }
  func.func @transform_1(%arg0: i32) -> (i32, i32) {
    %c0_i32 = arith.constant 0 : i32
    %c0_i32_0 = arith.constant 0 : i32
    return %c0_i32, %arg0 : i32, i32
  }
  func.func @transform_2(%arg0: i32) -> (i32, i32) {
    %c0_i32 = arith.constant 0 : i32
    %c0_i32_0 = arith.constant 0 : i32
    %c0_i32_1 = arith.constant 0 : i32
    return %c0_i32, %c0_i32_0 : i32, i32
  }
  func.func @transform_3(%arg0: i32) -> (i32, i32) {
    %c0_i32 = arith.constant 0 : i32
    %c0_i32_0 = arith.constant 0 : i32
    %c0_i32_1 = arith.constant 0 : i32
    return %c0_i32, %c0_i32_0 : i32, i32
  }
  func.func @transform_4(%arg0: i32) -> (i32, i32) {
    %c0_i32 = arith.constant 0 : i32
    %c0_i32_0 = arith.constant 0 : i32
    %c0_i32_1 = arith.constant 0 : i32
    return %c0_i32, %c0_i32_0 : i32, i32
  }
  func.func @transform_5(%arg0: i32) -> (i32, i32) {
    %c0_i32 = arith.constant 0 : i32
    %c0_i32_0 = arith.constant 0 : i32
    %c0_i32_1 = arith.constant 0 : i32
    return %c0_i32, %c0_i32_0 : i32, i32
  }
  func.func @transform_6(%arg0: i32) -> (i32, i32) {
    %c0_i32 = arith.constant 0 : i32
    %c0_i32_0 = arith.constant 0 : i32
    return %c0_i32, %arg0 : i32, i32
  }
  func.func @transform_7(%arg0: i32) -> (i32, i32) {
    %c0_i32 = arith.constant 0 : i32
    %c0_i32_0 = arith.constant 0 : i32
    return %c0_i32, %arg0 : i32, i32
  }
}

</mosaic_0001>

<llo_original>
// kernel: stochastic_policy_forward.1
$region0: #{stochastic_policy_forward.1}
  #allocation0 [shape = 'u32[]', space=smem, size = 0x4, offset = 0x4, fixed_abs, tag = 'smem constant byte address 0x4 - core index']
  #allocation1 [shape = 'u32[144,128]{1,0:T(1,128)}', space=vmem, size = 0x12000, scoped, tag = 'internal scratch']
  %s0 = inlined_call_operand.vmem [shape: f32[16,128], index: 0, kind: input, shape index: {}]
  %s1 = inlined_call_operand.vmem [shape: f32[8,128], index: 1, kind: input, shape index: {}]
  %s2 = inlined_call_operand.vmem [shape: f32[248,1], index: 2, kind: input, shape index: {}]
  %s3 = inlined_call_operand.vmem [shape: f32[32,16], index: 3, kind: input, shape index: {}]
  %s4 = inlined_call_operand.vmem [shape: f32[32,32], index: 4, kind: input, shape index: {}]
  %s5 = inlined_call_operand.vmem [shape: f32[8,32], index: 5, kind: input, shape index: {}]
  %s6 = inlined_call_operand.vmem [shape: f32[8,128], index: 6, kind: output, shape index: {0}]
  %s7 = inlined_call_operand.vmem [shape: f32[1,128], index: 7, kind: output, shape index: {1}]
  %8 = xla_tuple %s6, %s7
  %s9 = sld [smem:[#allocation0]]
  $region42: #{stochastic_policy_forward.1} parent=0
    _
  %s11 = ssub.s32 1, %s9
  %s12 = scalar_select 0, %s11, %s9
  // Predicated region
  $region2: #{stochastic_policy_forward.1} parent=0 // pred_check
    _
  $region3: #{stochastic_policy_forward.1} parent=0 // pred_check_branch
    %14 = sbr.rel (0) target = $region5
  $region4: #{stochastic_policy_forward.1} parent=0 // pred_region
    _
  $region5: #{stochastic_policy_forward.1} parent=0 // pred_fallthru
    _
  // Predicated region
  $region6: #{stochastic_policy_forward.1} parent=0 // pred_check
    _
  $region7: #{stochastic_policy_forward.1} parent=0 // pred_check_branch
    %16 = sbr.rel (0) target = $region9
  $region8: #{stochastic_policy_forward.1} parent=0 // pred_region
    _
  $region9: #{stochastic_policy_forward.1} parent=0 // pred_fallthru
    _
  // Predicated region
  $region10: #{stochastic_policy_forward.1} parent=0 // pred_check
    _
  $region11: #{stochastic_policy_forward.1} parent=0 // pred_check_branch
    %18 = sbr.rel (0) target = $region13
  $region12: #{stochastic_policy_forward.1} parent=0 // pred_region
    _
  $region13: #{stochastic_policy_forward.1} parent=0 // pred_fallthru
    _
  // Predicated region
  $region14: #{stochastic_policy_forward.1} parent=0 // pred_check
    _
  $region15: #{stochastic_policy_forward.1} parent=0 // pred_check_branch
    %20 = sbr.rel (0) target = $region17
  $region16: #{stochastic_policy_forward.1} parent=0 // pred_region
    _
  $region17: #{stochastic_policy_forward.1} parent=0 // pred_fallthru
    _
  // Predicated region
  $region18: #{stochastic_policy_forward.1} parent=0 // pred_check
    _
  $region19: #{stochastic_policy_forward.1} parent=0 // pred_check_branch
    %22 = sbr.rel (0) target = $region21
  $region20: #{stochastic_policy_forward.1} parent=0 // pred_region
    _
  $region21: #{stochastic_policy_forward.1} parent=0 // pred_fallthru
    _
  // Predicated region
  $region22: #{stochastic_policy_forward.1} parent=0 // pred_check
    _
  $region23: #{stochastic_policy_forward.1} parent=0 // pred_check_branch
    %24 = sbr.rel (0) target = $region25
  $region24: #{stochastic_policy_forward.1} parent=0 // pred_region
    _
  $region25: #{stochastic_policy_forward.1} parent=0 // pred_fallthru
    _
  %v25 = vld [vmem:[%s0] sm:$0xff]
  %v26 = vld [vmem:[%s0 + $0x8] sm:$0xff]
  %v27 = vld [vmem:[%s2] sm:$0xff]
  %v28 = vld [vmem:[%s2 + $0x8] sm:$0xff]
  %v29 = vld [vmem:[%s2 + $0x10] sm:$0xff]
  %v30 = vld [vmem:[%s2 + $0x18] sm:$0xff]
  %v31 = vadd.f32 %v25, %v26
  %v32 = vrot.slane %v31, 4
  %v33 = vadd.f32 %v31, %v32
  %v34 = vrot.slane %v33, 2
  %v35 = vadd.f32 %v33, %v34
  %v36 = vrot.slane %v35, 1
  %v37 = vadd.f32 %v35, %v36
  %v38 = vrcp.pop 16.0
  %v39 = vmul.f32 %v37, %v38
  %v40 = vsub.f32 %v25, %v39
  %v41 = vsub.f32 %v26, %v39
  %v42 = vmul.f32 %v40, %v40
  %v43 = vmul.f32 %v41, %v41
  %v44 = vadd.f32 %v42, %v43
  %v45 = vrot.slane %v44, 4
  %v46 = vadd.f32 %v44, %v45
  %v47 = vrot.slane %v46, 2
  %v48 = vadd.f32 %v46, %v47
  %v49 = vrot.slane %v48, 1
  %v50 = vadd.f32 %v48, %v49
  %v51 = vmul.f32 %v50, %v38
  %v52 = vadd.f32 %v51, 1e-05
  %v53 = vrsqrt.pop %v52
  %v54 = vmul.f32 %v40, %v53
  %v55 = vmul.f32 %v41, %v53
  %57 = vset.pattern.permute.xlu0 0
  %58 = vperm.xlu0 %57, %v27
  %v59 = vpop.permute.xlu0 %58
  %62 = vset.pattern.permute.xlu0 0
  %63 = vperm.xlu0 %62, %v28
  %v64 = vpop.permute.xlu0 %63
  %v66 = vmul.f32 %v54, %v59
  %v67 = vmul.f32 %v55, %v64
  %69 = vset.pattern.permute.xlu0 0
  %70 = vperm.xlu0 %69, %v29
  %v71 = vpop.permute.xlu0 %70
  %74 = vset.pattern.permute.xlu0 0
  %75 = vperm.xlu0 %74, %v30
  %v76 = vpop.permute.xlu0 %75
  %v78 = vadd.f32 %v66, %v71
  %v79 = vadd.f32 %v67, %v76
  %v80 = vld [vmem:[%s3] sm:$0xff]
  %v81 = vld [vmem:[%s3 + $0x8] sm:$0xff]
  %v82 = vld [vmem:[%s3 + $0x10] sm:$0xff]
  %v83 = vld [vmem:[%s3 + $0x18] sm:$0xff]
  %v84 = vld [vmem:[%s2 + $0x20] sm:$0xff]
  %v85 = vld [vmem:[%s2 + $0x28] sm:$0xff]
  %v86 = vld [vmem:[%s2 + $0x30] sm:$0xff]
  %v87 = vld [vmem:[%s2 + $0x38] sm:$0xff]
  %89 = vset.pattern.permute.xlu0 0
  %90 = vperm.xlu0 %89, %v84
  %v91 = vpop.permute.xlu0 %90
  %94 = vset.pattern.permute.xlu0 0
  %95 = vperm.xlu0 %94, %v85
  %v96 = vpop.permute.xlu0 %95
  %99 = vset.pattern.permute.xlu0 0
  %100 = vperm.xlu0 %99, %v86
  %v101 = vpop.permute.xlu0 %100
  %104 = vset.pattern.permute.xlu0 0
  %105 = vperm.xlu0 %104, %v87
  %v106 = vpop.permute.xlu0 %105
  %vm108 = vcmask 130048
  %v110 = vsel %vm108, %v80, 0
  %v113 = vsel %vm108, %v81, 0
  %v116 = vsel %vm108, %v82, 0
  %v119 = vsel %vm108, %v83, 0
  %121 = vmatprep.subr.mxu0 0.0
  %122 = vmatpush1.msra.mxu0 0.0
  %123 = vmatprep.subr.mxu0 0.0
  %124 = vmatpush1.msra.mxu0 0.0
  %125 = vmatprep.subr.mxu0 0.0
  %126 = vmatpush1.msra.mxu0 0.0
  %127 = vmatprep.subr.mxu0 0.0
  %128 = vmatpush1.msra.mxu0 0.0
  %129 = vmatprep.subr.mxu0 0.0
  %130 = vmatpush1.msra.mxu0 0.0
  %131 = vmatprep.subr.mxu0 0.0
  %132 = vmatpush1.msra.mxu0 0.0
  %133 = vmatprep.subr.mxu0 0.0
  %134 = vmatpush1.msra.mxu0 0.0
  %135 = vmatprep.subr.mxu0 0.0
  %136 = vmatpush1.msra.mxu0 0.0
  %137 = vmatprep.subr.mxu0 0.0
  %138 = vmatpush1.msra.mxu0 0.0
  %139 = vmatprep.subr.mxu0 0.0
  %140 = vmatpush1.msra.mxu0 0.0
  %141 = vmatprep.subr.mxu0 0.0
  %142 = vmatpush1.msra.mxu0 0.0
  %143 = vmatprep.subr.mxu0 0.0
  %144 = vmatpush1.msra.mxu0 0.0
  %145 = vmatprep.subr.mxu0 0.0
  %146 = vmatpush1.msra.mxu0 0.0
  %147 = vmatprep.subr.mxu0 0.0
  %148 = vmatpush1.msra.mxu0 0.0
  %149 = vmatprep.subr.mxu0 0.0
  %150 = vmatpush1.msra.mxu0 %v79
  %151 = vmatprep.subr.mxu0 0.0
  %152 = vmatpush1.msra.mxu0 %v78
  %153 = vmatprep.subr.mxu0 0.0
  %154 = vmatpush2.msra.mxu0 0.0
  %155 = vmatprep.subr.mxu0 0.0
  %156 = vmatpush2.msra.mxu0 0.0
  %157 = vmatprep.subr.mxu0 0.0
  %158 = vmatpush2.msra.mxu0 0.0
  %159 = vmatprep.subr.mxu0 0.0
  %160 = vmatpush2.msra.mxu0 0.0
  %161 = vmatprep.subr.mxu0 0.0
  %162 = vmatpush2.msra.mxu0 0.0
  %163 = vmatprep.subr.mxu0 0.0
  %164 = vmatpush2.msra.mxu0 0.0
  %165 = vmatprep.subr.mxu0 0.0
  %166 = vmatpush2.msra.mxu0 0.0
  %167 = vmatprep.subr.mxu0 0.0
  %168 = vmatpush2.msra.mxu0 0.0
  %169 = vmatprep.subr.mxu0 0.0
  %170 = vmatpush2.msra.mxu0 0.0
  %171 = vmatprep.subr.mxu0 0.0
  %172 = vmatpush2.msra.mxu0 0.0
  %173 = vmatprep.subr.mxu0 0.0
  %174 = vmatpush2.msra.mxu0 0.0
  %175 = vmatprep.subr.mxu0 0.0
  %176 = vmatpush2.msra.mxu0 0.0
  %177 = vmatprep.subr.mxu0 0.0
  %178 = vmatpush2.msra.mxu0 0.0
  %179 = vmatprep.subr.mxu0 0.0
  %180 = vmatpush2.msra.mxu0 0.0
  %181 = vmatprep.subr.mxu0 0.0
  %182 = vmatpush2.msra.mxu0 0.0
  %183 = vmatprep.subr.mxu0 0.0
  %184 = vmatpush2.msra.mxu0 0.0
  %185 = vmatprep.mubr.f32.mxu0 0.0
  %186 = vmatmul.mubr.f32.gmra.mxu0 %v110
  %v187 = vpop.f32.mrf.mxu0
  %v188 = vadd.f32 %v91, %v187
  %v189 = vpop.f32.mrf.mxu0
  %190 = vmatprep.mubr.f32.mxu0 0.0
  %191 = vmatmul.mubr.f32.gmra.mxu0 %v113
  %v192 = vpop.f32.mrf.mxu0
  %v193 = vadd.f32 %v96, %v192
  %v194 = vpop.f32.mrf.mxu0
  %195 = vmatprep.mubr.f32.mxu0 0.0
  %196 = vmatmul.mubr.f32.gmra.mxu0 %v116
  %v197 = vpop.f32.mrf.mxu0
  %v198 = vadd.f32 %v101, %v197
  %v199 = vpop.f32.mrf.mxu0
  %200 = vmatprep.mubr.f32.mxu0 0.0
  %201 = vmatmul.mubr.f32.gmra.mxu0 %v119
  %v202 = vpop.f32.mrf.mxu0
  %v203 = vadd.f32 %v106, %v202
  %v204 = vpop.f32.mrf.mxu0
  %205 = vdwg.mxu0
  %v206 = vmax.f32 %v188, 0.0
  %v207 = vmax.f32 %v193, 0.0
  %v208 = vmax.f32 %v198, 0.0
  %v209 = vmax.f32 %v203, 0.0
  %v210 = vld [vmem:[%s2 + $0x40] sm:$0xff]
  %v211 = vld [vmem:[%s2 + $0x48] sm:$0xff]
  %v212 = vld [vmem:[%s2 + $0x50] sm:$0xff]
  %v213 = vld [vmem:[%s2 + $0x58] sm:$0xff]
  %v214 = vld [vmem:[%s2 + $0x60] sm:$0xff]
  %v215 = vld [vmem:[%s2 + $0x68] sm:$0xff]
  %v216 = vld [vmem:[%s2 + $0x70] sm:$0xff]
  %v217 = vld [vmem:[%s2 + $0x78] sm:$0xff]
  %v218 = vadd.f32 %v206, %v207
  %v219 = vadd.f32 %v218, %v208
  %v220 = vadd.f32 %v219, %v209
  %v221 = vrot.slane %v220, 4
  %v222 = vadd.f32 %v220, %v221
  %v223 = vrot.slane %v222, 2
  %v224 = vadd.f32 %v222, %v223
  %v225 = vrot.slane %v224, 1
  %v226 = vadd.f32 %v224, %v225
  %v227 = vrcp.pop 32.0
  %v228 = vmul.f32 %v226, %v227
  %v229 = vsub.f32 %v206, %v228
  %v230 = vsub.f32 %v207, %v228
  %v231 = vsub.f32 %v208, %v228
  %v232 = vsub.f32 %v209, %v228
  %v233 = vmul.f32 %v229, %v229
  %v234 = vmul.f32 %v230, %v230
  %v235 = vmul.f32 %v231, %v231
  %v236 = vmul.f32 %v232, %v232
  %v237 = vadd.f32 %v233, %v234
  %v238 = vadd.f32 %v237, %v235
  %v239 = vadd.f32 %v238, %v236
  %v240 = vrot.slane %v239, 4
  %v241 = vadd.f32 %v239, %v240
  %v242 = vrot.slane %v241, 2
  %v243 = vadd.f32 %v241, %v242
  %v244 = vrot.slane %v243, 1
  %v245 = vadd.f32 %v243, %v244
  %v246 = vmul.f32 %v245, %v227
  %v247 = vadd.f32 %v246, 1e-05
  %v248 = vrsqrt.pop %v247
  %v249 = vmul.f32 %v229, %v248
  %v250 = vmul.f32 %v230, %v248
  %v251 = vmul.f32 %v231, %v248
  %v252 = vmul.f32 %v232, %v248
  %254 = vset.pattern.permute.xlu0 0
  %255 = vperm.xlu0 %254, %v210
  %v256 = vpop.permute.xlu0 %255
  %259 = vset.pattern.permute.xlu0 0
  %260 = vperm.xlu0 %259, %v211
  %v261 = vpop.permute.xlu0 %260
  %264 = vset.pattern.permute.xlu0 0
  %265 = vperm.xlu0 %264, %v212
  %v266 = vpop.permute.xlu0 %265
  %269 = vset.pattern.permute.xlu0 0
  %270 = vperm.xlu0 %269, %v213
  %v271 = vpop.permute.xlu0 %270
  %v273 = vmul.f32 %v249, %v256
  %v274 = vmul.f32 %v250, %v261
  %v275 = vmul.f32 %v251, %v266
  %v276 = vmul.f32 %v252, %v271
  %278 = vset.pattern.permute.xlu0 0
  %279 = vperm.xlu0 %278, %v214
  %v280 = vpop.permute.xlu0 %279
  %283 = vset.pattern.permute.xlu0 0
  %284 = vperm.xlu0 %283, %v215
  %v285 = vpop.permute.xlu0 %284
  %288 = vset.pattern.permute.xlu0 0
  %289 = vperm.xlu0 %288, %v216
  %v290 = vpop.permute.xlu0 %289
  %293 = vset.pattern.permute.xlu0 0
  %294 = vperm.xlu0 %293, %v217
  %v295 = vpop.permute.xlu0 %294
  %v297 = vadd.f32 %v273, %v280
  %v298 = vadd.f32 %v274, %v285
  %v299 = vadd.f32 %v275, %v290
  %v300 = vadd.f32 %v276, %v295
  %v301 = vld [vmem:[%s4] sm:$0xff]
  %v302 = vld [vmem:[%s4 + $0x8] sm:$0xff]
  %v303 = vld [vmem:[%s4 + $0x10] sm:$0xff]
  %v304 = vld [vmem:[%s4 + $0x18] sm:$0xff]
  %v305 = vld [vmem:[%s2 + $0x80] sm:$0xff]
  %v306 = vld [vmem:[%s2 + $0x88] sm:$0xff]
  %v307 = vld [vmem:[%s2 + $0x90] sm:$0xff]
  %v308 = vld [vmem:[%s2 + $0x98] sm:$0xff]
  %310 = vset.pattern.permute.xlu0 0
  %311 = vperm.xlu0 %310, %v305
  %v312 = vpop.permute.xlu0 %311
  %315 = vset.pattern.permute.xlu0 0
  %316 = vperm.xlu0 %315, %v306
  %v317 = vpop.permute.xlu0 %316
  %320 = vset.pattern.permute.xlu0 0
  %321 = vperm.xlu0 %320, %v307
  %v322 = vpop.permute.xlu0 %321
  %325 = vset.pattern.permute.xlu0 0
  %326 = vperm.xlu0 %325, %v308
  %v327 = vpop.permute.xlu0 %326
  %vm329 = vcmask 261120
  %v331 = vsel %vm329, %v301, 0
  %v334 = vsel %vm329, %v302, 0
  %v337 = vsel %vm329, %v303, 0
  %v340 = vsel %vm329, %v304, 0
  %342 = vmatprep.subr.mxu0 0.0
  %343 = vmatpush1.msra.mxu0 0.0
  %344 = vmatprep.subr.mxu0 0.0
  %345 = vmatpush1.msra.mxu0 0.0
  %346 = vmatprep.subr.mxu0 0.0
  %347 = vmatpush1.msra.mxu0 0.0
  %348 = vmatprep.subr.mxu0 0.0
  %349 = vmatpush1.msra.mxu0 0.0
  %350 = vmatprep.subr.mxu0 0.0
  %351 = vmatpush1.msra.mxu0 0.0
  %352 = vmatprep.subr.mxu0 0.0
  %353 = vmatpush1.msra.mxu0 0.0
  %354 = vmatprep.subr.mxu0 0.0
  %355 = vmatpush1.msra.mxu0 0.0
  %356 = vmatprep.subr.mxu0 0.0
  %357 = vmatpush1.msra.mxu0 0.0
  %358 = vmatprep.subr.mxu0 0.0
  %359 = vmatpush1.msra.mxu0 0.0
  %360 = vmatprep.subr.mxu0 0.0
  %361 = vmatpush1.msra.mxu0 0.0
  %362 = vmatprep.subr.mxu0 0.0
  %363 = vmatpush1.msra.mxu0 0.0
  %364 = vmatprep.subr.mxu0 0.0
  %365 = vmatpush1.msra.mxu0 0.0
  %366 = vmatprep.subr.mxu0 0.0
  %367 = vmatpush1.msra.mxu0 %v300
  %368 = vmatprep.subr.mxu0 0.0
  %369 = vmatpush1.msra.mxu0 %v299
  %370 = vmatprep.subr.mxu0 0.0
  %371 = vmatpush1.msra.mxu0 %v298
  %372 = vmatprep.subr.mxu0 0.0
  %373 = vmatpush1.msra.mxu0 %v297
  %374 = vmatprep.subr.mxu0 0.0
  %375 = vmatpush2.msra.mxu0 0.0
  %376 = vmatprep.subr.mxu0 0.0
  %377 = vmatpush2.msra.mxu0 0.0
  %378 = vmatprep.subr.mxu0 0.0
  %379 = vmatpush2.msra.mxu0 0.0
  %380 = vmatprep.subr.mxu0 0.0
  %381 = vmatpush2.msra.mxu0 0.0
  %382 = vmatprep.subr.mxu0 0.0
  %383 = vmatpush2.msra.mxu0 0.0
  %384 = vmatprep.subr.mxu0 0.0
  %385 = vmatpush2.msra.mxu0 0.0
  %386 = vmatprep.subr.mxu0 0.0
  %387 = vmatpush2.msra.mxu0 0.0
  %388 = vmatprep.subr.mxu0 0.0
  %389 = vmatpush2.msra.mxu0 0.0
  %390 = vmatprep.subr.mxu0 0.0
  %391 = vmatpush2.msra.mxu0 0.0
  %392 = vmatprep.subr.mxu0 0.0
  %393 = vmatpush2.msra.mxu0 0.0
  %394 = vmatprep.subr.mxu0 0.0
  %395 = vmatpush2.msra.mxu0 0.0
  %396 = vmatprep.subr.mxu0 0.0
  %397 = vmatpush2.msra.mxu0 0.0
  %398 = vmatprep.subr.mxu0 0.0
  %399 = vmatpush2.msra.mxu0 0.0
  %400 = vmatprep.subr.mxu0 0.0
  %401 = vmatpush2.msra.mxu0 0.0
  %402 = vmatprep.subr.mxu0 0.0
  %403 = vmatpush2.msra.mxu0 0.0
  %404 = vmatprep.subr.mxu0 0.0
  %405 = vmatpush2.msra.mxu0 0.0
  %406 = vmatprep.mubr.f32.mxu0 0.0
  %407 = vmatmul.mubr.f32.gmra.mxu0 %v331
  %v408 = vpop.f32.mrf.mxu0
  %v409 = vadd.f32 %v312, %v408
  %v410 = vpop.f32.mrf.mxu0
  %411 = vmatprep.mubr.f32.mxu0 0.0
  %412 = vmatmul.mubr.f32.gmra.mxu0 %v334
  %v413 = vpop.f32.mrf.mxu0
  %v414 = vadd.f32 %v317, %v413
  %v415 = vpop.f32.mrf.mxu0
  %416 = vmatprep.mubr.f32.mxu0 0.0
  %417 = vmatmul.mubr.f32.gmra.mxu0 %v337
  %v418 = vpop.f32.mrf.mxu0
  %v419 = vadd.f32 %v322, %v418
  %v420 = vpop.f32.mrf.mxu0
  %421 = vmatprep.mubr.f32.mxu0 0.0
  %422 = vmatmul.mubr.f32.gmra.mxu0 %v340
  %v423 = vpop.f32.mrf.mxu0
  %v424 = vadd.f32 %v327, %v423
  %v425 = vpop.f32.mrf.mxu0
  %426 = vdwg.mxu0
  %v427 = vmax.f32 %v409, 0.0
  %v428 = vmax.f32 %v414, 0.0
  %v429 = vmax.f32 %v419, 0.0
  %v430 = vmax.f32 %v424, 0.0
  %v431 = vld [vmem:[%s2 + $0xa0] sm:$0xff]
  %v432 = vld [vmem:[%s2 + $0xa8] sm:$0xff]
  %v433 = vld [vmem:[%s2 + $0xb0] sm:$0xff]
  %v434 = vld [vmem:[%s2 + $0xb8] sm:$0xff]
  %v435 = vld [vmem:[%s2 + $0xc0] sm:$0xff]
  %v436 = vld [vmem:[%s2 + $0xc8] sm:$0xff]
  %v437 = vld [vmem:[%s2 + $0xd0] sm:$0xff]
  %v438 = vld [vmem:[%s2 + $0xd8] sm:$0xff]
  %v439 = vadd.f32 %v427, %v428
  %v440 = vadd.f32 %v439, %v429
  %v441 = vadd.f32 %v440, %v430
  %v442 = vrot.slane %v441, 4
  %v443 = vadd.f32 %v441, %v442
  %v444 = vrot.slane %v443, 2
  %v445 = vadd.f32 %v443, %v444
  %v446 = vrot.slane %v445, 1
  %v447 = vadd.f32 %v445, %v446
  %v448 = vmul.f32 %v447, %v227
  %v449 = vsub.f32 %v427, %v448
  %v450 = vsub.f32 %v428, %v448
  %v451 = vsub.f32 %v429, %v448
  %v452 = vsub.f32 %v430, %v448
  %v453 = vmul.f32 %v449, %v449
  %v454 = vmul.f32 %v450, %v450
  %v455 = vmul.f32 %v451, %v451
  %v456 = vmul.f32 %v452, %v452
  %v457 = vadd.f32 %v453, %v454
  %v458 = vadd.f32 %v457, %v455
  %v459 = vadd.f32 %v458, %v456
  %v460 = vrot.slane %v459, 4
  %v461 = vadd.f32 %v459, %v460
  %v462 = vrot.slane %v461, 2
  %v463 = vadd.f32 %v461, %v462
  %v464 = vrot.slane %v463, 1
  %v465 = vadd.f32 %v463, %v464
  %v466 = vmul.f32 %v465, %v227
  %v467 = vadd.f32 %v466, 1e-05
  %v468 = vrsqrt.pop %v467
  %v469 = vmul.f32 %v449, %v468
  %v470 = vmul.f32 %v450, %v468
  %v471 = vmul.f32 %v451, %v468
  %v472 = vmul.f32 %v452, %v468
  %474 = vset.pattern.permute.xlu0 0
  %475 = vperm.xlu0 %474, %v431
  %v476 = vpop.permute.xlu0 %475
  %479 = vset.pattern.permute.xlu0 0
  %480 = vperm.xlu0 %479, %v432
  %v481 = vpop.permute.xlu0 %480
  %484 = vset.pattern.permute.xlu0 0
  %485 = vperm.xlu0 %484, %v433
  %v486 = vpop.permute.xlu0 %485
  %489 = vset.pattern.permute.xlu0 0
  %490 = vperm.xlu0 %489, %v434
  %v491 = vpop.permute.xlu0 %490
  %v493 = vmul.f32 %v469, %v476
  %v494 = vmul.f32 %v470, %v481
  %v495 = vmul.f32 %v471, %v486
  %v496 = vmul.f32 %v472, %v491
  %498 = vset.pattern.permute.xlu0 0
  %499 = vperm.xlu0 %498, %v435
  %v500 = vpop.permute.xlu0 %499
  %503 = vset.pattern.permute.xlu0 0
  %504 = vperm.xlu0 %503, %v436
  %v505 = vpop.permute.xlu0 %504
  %508 = vset.pattern.permute.xlu0 0
  %509 = vperm.xlu0 %508, %v437
  %v510 = vpop.permute.xlu0 %509
  %513 = vset.pattern.permute.xlu0 0
  %514 = vperm.xlu0 %513, %v438
  %v515 = vpop.permute.xlu0 %514
  %v517 = vadd.f32 %v493, %v500
  %v518 = vadd.f32 %v494, %v505
  %v519 = vadd.f32 %v495, %v510
  %v520 = vadd.f32 %v496, %v515
  %v521 = vld [vmem:[%s5] sm:$0xff]
  %v522 = vld [vmem:[%s2 + $0xe0] sm:$0xff]
  %524 = vset.pattern.permute.xlu0 0
  %525 = vperm.xlu0 %524, %v522
  %v526 = vpop.permute.xlu0 %525
  %v529 = vsel %vm329, %v521, 0
  %531 = vmatprep.subr.mxu0 0.0
  %532 = vmatpush1.msra.mxu0 0.0
  %533 = vmatprep.subr.mxu0 0.0
  %534 = vmatpush1.msra.mxu0 0.0
  %535 = vmatprep.subr.mxu0 0.0
  %536 = vmatpush1.msra.mxu0 0.0
  %537 = vmatprep.subr.mxu0 0.0
  %538 = vmatpush1.msra.mxu0 0.0
  %539 = vmatprep.subr.mxu0 0.0
  %540 = vmatpush1.msra.mxu0 0.0
  %541 = vmatprep.subr.mxu0 0.0
  %542 = vmatpush1.msra.mxu0 0.0
  %543 = vmatprep.subr.mxu0 0.0
  %544 = vmatpush1.msra.mxu0 0.0
  %545 = vmatprep.subr.mxu0 0.0
  %546 = vmatpush1.msra.mxu0 0.0
  %547 = vmatprep.subr.mxu0 0.0
  %548 = vmatpush1.msra.mxu0 0.0
  %549 = vmatprep.subr.mxu0 0.0
  %550 = vmatpush1.msra.mxu0 0.0
  %551 = vmatprep.subr.mxu0 0.0
  %552 = vmatpush1.msra.mxu0 0.0
  %553 = vmatprep.subr.mxu0 0.0
  %554 = vmatpush1.msra.mxu0 0.0
  %555 = vmatprep.subr.mxu0 0.0
  %556 = vmatpush1.msra.mxu0 %v520
  %557 = vmatprep.subr.mxu0 0.0
  %558 = vmatpush1.msra.mxu0 %v519
  %559 = vmatprep.subr.mxu0 0.0
  %560 = vmatpush1.msra.mxu0 %v518
  %561 = vmatprep.subr.mxu0 0.0
  %562 = vmatpush1.msra.mxu0 %v517
  %563 = vmatprep.subr.mxu0 0.0
  %564 = vmatpush2.msra.mxu0 0.0
  %565 = vmatprep.subr.mxu0 0.0
  %566 = vmatpush2.msra.mxu0 0.0
  %567 = vmatprep.subr.mxu0 0.0
  %568 = vmatpush2.msra.mxu0 0.0
  %569 = vmatprep.subr.mxu0 0.0
  %570 = vmatpush2.msra.mxu0 0.0
  %571 = vmatprep.subr.mxu0 0.0
  %572 = vmatpush2.msra.mxu0 0.0
  %573 = vmatprep.subr.mxu0 0.0
  %574 = vmatpush2.msra.mxu0 0.0
  %575 = vmatprep.subr.mxu0 0.0
  %576 = vmatpush2.msra.mxu0 0.0
  %577 = vmatprep.subr.mxu0 0.0
  %578 = vmatpush2.msra.mxu0 0.0
  %579 = vmatprep.subr.mxu0 0.0
  %580 = vmatpush2.msra.mxu0 0.0
  %581 = vmatprep.subr.mxu0 0.0
  %582 = vmatpush2.msra.mxu0 0.0
  %583 = vmatprep.subr.mxu0 0.0
  %584 = vmatpush2.msra.mxu0 0.0
  %585 = vmatprep.subr.mxu0 0.0
  %586 = vmatpush2.msra.mxu0 0.0
  %587 = vmatprep.subr.mxu0 0.0
  %588 = vmatpush2.msra.mxu0 0.0
  %589 = vmatprep.subr.mxu0 0.0
  %590 = vmatpush2.msra.mxu0 0.0
  %591 = vmatprep.subr.mxu0 0.0
  %592 = vmatpush2.msra.mxu0 0.0
  %593 = vmatprep.subr.mxu0 0.0
  %594 = vmatpush2.msra.mxu0 0.0
  %595 = vmatprep.mubr.f32.mxu0 0.0
  %596 = vmatmul.mubr.f32.gmra.mxu0 %v529
  %v597 = vpop.f32.mrf.mxu0
  %v598 = vadd.f32 %v526, %v597
  %v599 = vpop.f32.mrf.mxu0
  %600 = vdwg.mxu0
  %v601 = vld [vmem:[%s2 + $0xe8] sm:$0xff]
  %v602 = vld [vmem:[%s2 + $0xf0] sm:$0xff]
  %v603 = vld [vmem:[%s1] sm:$0xff]
  %605 = vset.pattern.permute.xlu0 0
  %606 = vperm.xlu0 %605, %v601
  %v607 = vpop.permute.xlu0 %606
  %v609 = vmul.f32 %v607, %v603
  %v610 = vadd.f32 %v598, %v609
  %v611 = vtanh.pop %v610
  %v612 = vmul.f32 %v603, -0.5
  %v613 = vmul.f32 %v612, %v603
  %615 = vset.pattern.permute.xlu0 0
  %616 = vperm.xlu0 %615, %v602
  %v617 = vpop.permute.xlu0 %616
  %v619 = vadd.f32 %v613, %v617
  %v620 = vmul.f32 %v610, -2.0
  %v621 = vmax.f32 %v620, 0.0
  %v622 = vand.u32 2147483647, %v620
  %v623 = vsub.f32 0.0, %v622
  %v624 = vmul.f32 %v623, 1.442695
  %v625 = vpow.pop %v624
  %v626 = vadd.f32 %v625, 1.0
  %v627 = vlog2.pop %v626
  %v628 = vmul.f32 %v627, 0.6931472
  %v629 = vmul.f32 -0.5, %v625
  %v630 = vadd.f32 %v629, 1.0
  %v631 = vmul.f32 %v630, %v625
  %v632 = vand.u32 2147483647, %v625
  %vm633 = vcmp.lt.f32.partialorder %v632, 0.0004427343
  %v634 = vsel %vm633, %v631, %v628
  %v635 = vadd.f32 %v621, %v634
  %v636 = vsub.f32 0.6931472, %v610
  %v637 = vsub.f32 %v636, %v635
  %v638 = vmul.f32 %v637, 2.0
  %v639 = vsub.f32 %v619, %v638
  %640 = vst [vmem:[%s6] sm:$0xff] %v611
  %v641 = vrot.slane %v639, 4
  %v642 = vadd.f32 %v639, %v641
  %v643 = vrot.slane %v642, 2
  %v644 = vadd.f32 %v642, %v643
  %v645 = vrot.slane %v644, 1
  %v646 = vadd.f32 %v644, %v645
  %647 = vst [vmem:[%s7] sm:$0x1] %v646
  // Predicated region
  $region26: #{stochastic_policy_forward.1} parent=0 // pred_check
    _
  $region27: #{stochastic_policy_forward.1} parent=0 // pred_check_branch
    %649 = sbr.rel (0) target = $region29
  $region28: #{stochastic_policy_forward.1} parent=0 // pred_region
    _
  $region29: #{stochastic_policy_forward.1} parent=0 // pred_fallthru
    _
  // Predicated region
  $region30: #{stochastic_policy_forward.1} parent=0 // pred_check
    _
  $region31: #{stochastic_policy_forward.1} parent=0 // pred_check_branch
    %651 = sbr.rel (0) target = $region33
  $region32: #{stochastic_policy_forward.1} parent=0 // pred_region
    _
  $region33: #{stochastic_policy_forward.1} parent=0 // pred_fallthru
    _
  // Predicated region
  $region34: #{stochastic_policy_forward.1} parent=0 // pred_check
    _
  $region35: #{stochastic_policy_forward.1} parent=0 // pred_check_branch
    %653 = sbr.rel (0) target = $region37
  $region36: #{stochastic_policy_forward.1} parent=0 // pred_region
    _
  $region37: #{stochastic_policy_forward.1} parent=0 // pred_fallthru
    _
  // Predicated region
  $region38: #{stochastic_policy_forward.1} parent=0 // pred_check
    _
  $region39: #{stochastic_policy_forward.1} parent=0 // pred_check_branch
    %655 = sbr.rel (0) target = $region41
  $region40: #{stochastic_policy_forward.1} parent=0 // pred_region
    _
  $region41: #{stochastic_policy_forward.1} parent=0 // pred_fallthru
    _

</llo_original>
